<compile_context>
chip_gen: v7x
topology: tpu7x:2x2x1
jax: 0.10.0
libtpu: 0.0.40
codegen_flags: <defaults>
</compile_context>

<pallas_src>
import jax
import jax.numpy as jnp
from jax.experimental import pallas as pl
from jax.experimental.pallas import tpu as pltpu


def _maxpool_encoder_kernel(ids_ref, emb_ref, w_ref, b_ref, o_ref):
    # ids_ref: (TB*S, 1) int32   token ids for TB batch rows, flattened over sequence
    # emb_ref: (V, Dw)    bf16   embedding table
    # w_ref:   (Dw, Dp)   bf16   projection weight, lane-padded to Dp (multiple of 128)
    # b_ref:   (1, Dp)    f32    projection bias, lane-padded
    # o_ref:   (TB, Dp)   f32    L2-normalized sentence embeddings (lane-padded)
    n = ids_ref.shape[0]
    v = emb_ref.shape[0]
    tb = o_ref.shape[0]
    s = n // tb

    ids = ids_ref[...]                                                     # (N, 1)
    onehot = (ids == jax.lax.broadcasted_iota(jnp.int32, (n, v), 1)
              ).astype(jnp.bfloat16)                                       # (N, V)

    # Fused embedding gather: exact row select via one-hot matmul on the MXU.
    x = jnp.dot(onehot, emb_ref[...],
                preferred_element_type=jnp.float32).astype(jnp.bfloat16)   # (N, Dw)

    # Linear projection: one fat (N, Dw) @ (Dw, Dp) bf16 matmul, f32 accumulation.
    y = jnp.dot(x, w_ref[...], preferred_element_type=jnp.float32)         # (N, Dp)
    y = y + b_ref[...]

    # TODO(synk): if the original MaxPooling masks padding tokens via src_pos, apply
    # jnp.where(mask, y, -inf) here before the max (src_pos is otherwise unused).
    m = jnp.max(y.reshape(tb, s, -1), axis=1)                              # (TB, Dp)

    # F.normalize along dim=1: x / max(||x||_2, 1e-12) == x * rsqrt(max(ss, 1e-24)).
    ss = jnp.sum(m * m, axis=-1, keepdims=True)
    o_ref[...] = (m * jax.lax.rsqrt(jnp.maximum(ss, 1e-24))).astype(o_ref.dtype)


def sentence_encoder_forward(src_seq, src_pos, emb_table, w, b, *, tb=None):
    """Forward pass of SentenceEncoder('MaxPooling').

    src_seq:   (B, S) int32 token ids
    src_pos:   (B, S) int32 positions (unused by the MaxPooling encoder path)
    emb_table: (V, d_word) float   pretrained embedding table
    w:         (d_word, d_model) float, b: (d_model,) float
    returns:   (B, d_model) float32, L2-normalized rows
    """
    del src_pos  # MaxPooling path ignores positions
    B, S = src_seq.shape
    V, Dw = emb_table.shape
    Dm = w.shape[1]

    if tb is None:
        tb = B                      # whole batch in one program at these sizes
    assert B % tb == 0
    assert tb == B or tb % 8 == 0, "batch block must be 8-aligned when sub-blocking"
    nb = B // tb

    LANES = 128
    Dp = ((Dm + LANES - 1) // LANES) * LANES   # lane-dense padded d_model

    # Pad the projection to Dp lanes; padded weight/bias columns are zero, so the
    # corresponding outputs are exactly zero and the L2 norm / max are unaffected.
    w_p = jnp.zeros((Dw, Dp), jnp.bfloat16).at[:, :Dm].set(w.astype(jnp.bfloat16))
    b_p = jnp.zeros((1, Dp), jnp.float32).at[0, :Dm].set(b.astype(jnp.float32))
    emb_bf16 = emb_table.astype(jnp.bfloat16)
    ids = src_seq.reshape(B * S, 1).astype(jnp.int32)

    out = pl.pallas_call(
        _maxpool_encoder_kernel,
        out_shape=jax.ShapeDtypeStruct((B, Dp), jnp.float32),
        grid_spec=pltpu.PrefetchScalarGridSpec(
            num_scalar_prefetch=0,
            grid=(nb,),
            in_specs=[
                pl.BlockSpec((tb * S, 1), lambda i: (i, 0)),   # token ids
                pl.BlockSpec((V, Dw), lambda i: (0, 0)),       # embedding table (bf16)
                pl.BlockSpec((Dw, Dp), lambda i: (0, 0)),      # projection weight (bf16)
                pl.BlockSpec((1, Dp), lambda i: (0, 0)),       # projection bias (f32)
            ],
            out_specs=pl.BlockSpec((tb, Dp), lambda i: (i, 0)),
        ),
        compiler_params=pltpu.CompilerParams(
            dimension_semantics=("parallel",)),
    )(ids, emb_bf16, w_p, b_p)

    return out[:, :Dm]


if __name__ == "__main__":
    # Small deterministic setup consistent with the module:
    #   vocab = 50, d_word = 32 (pretrained embedding dim), d_model = 32, batch = 2, seq = 8
    V, D_WORD, D_MODEL = 50, 32, 32
    B, S = 2, 8

    key = jax.random.PRNGKey(0)
    k_emb, k_w, k_b, k_ids = jax.random.split(key, 4)

    emb_table = jax.random.normal(k_emb, (V, D_WORD), dtype=jnp.float32)
    w = jax.random.normal(k_w, (D_WORD, D_MODEL), dtype=jnp.float32) * 0.1
    b = jax.random.normal(k_b, (D_MODEL,), dtype=jnp.float32) * 0.1

    src_seq = jax.random.randint(k_ids, (B, S), 0, V, dtype=jnp.int32)
    src_pos = jnp.tile(jnp.arange(1, S + 1, dtype=jnp.int32)[None, :], (B, 1))

    out = sentence_encoder_forward(src_seq, src_pos, emb_table, w, b)
    out = jax.block_until_ready(out)
    assert out.shape == (B, D_MODEL)

    # Pure-JAX f32 reference of the same forward pass (module semantics).
    ref_seq = jnp.take(emb_table, src_seq, axis=0)
    ref = jnp.max(jnp.einsum("bsd,de->bse", ref_seq, w) + b, axis=1)
    ref = ref / jnp.maximum(jnp.linalg.norm(ref, axis=1, keepdims=True), 1e-12)
    # Kernel uses bf16 MXU operands with f32 accumulation -> allow bf16-level tolerance.
    assert jnp.allclose(out, ref, atol=2e-2), "mismatch vs JAX reference"

    print("KERNEL_OK")
</pallas_src>

<mosaic_0001>
module attributes {stable_mosaic.version = 11 : i64} {
  func.func @_maxpool_encoder_kernel(%arg0: i32, %arg1: memref<16x1xi32, #tpu.memory_space<vmem>>, %arg2: memref<50x32xbf16, #tpu.memory_space<vmem>>, %arg3: memref<32x128xbf16, #tpu.memory_space<vmem>>, %arg4: memref<1x128xf32, #tpu.memory_space<vmem>>, %arg5: memref<2x128xf32, #tpu.memory_space<vmem>>) attributes {dimension_semantics = [#tpu.dimension_semantics<parallel>], iteration_bounds = array<i64: 1>, scalar_prefetch = 0 : i64, scratch_operands = 0 : i64, tpu.core_type = #tpu.core_type<tc>, window_params = [{transform_indices = @transform_0, window_bounds = array<i64: 16, 1>}, {pipeline_mode = #tpu.pipeline_mode<synchronous>, transform_indices = @transform_1, window_bounds = array<i64: 50, 32>}, {pipeline_mode = #tpu.pipeline_mode<synchronous>, transform_indices = @transform_2, window_bounds = array<i64: 32, 128>}, {pipeline_mode = #tpu.pipeline_mode<synchronous>, transform_indices = @transform_3, window_bounds = array<i64: 1, 128>}, {transform_indices = @transform_4, window_bounds = array<i64: 2, 128>}]} {
    %c0 = arith.constant 0 : index
    %c0_0 = arith.constant 0 : index
    %0 = vector.load %arg1[%c0, %c0_0] : memref<16x1xi32, #tpu.memory_space<vmem>>, vector<16x1xi32>
    %1 = tpu.iota {dimensions = array<i32: 1>} : vector<16x50xi32>
    %2 = vector.broadcast %0 : vector<16x1xi32> to vector<16x50xi32>
    %3 = arith.cmpi eq, %2, %1 : vector<16x50xi32>
    %4 = arith.extui %3 : vector<16x50xi1> to vector<16x50xi32>
    %5 = arith.sitofp %4 : vector<16x50xi32> to vector<16x50xf32>
    %6 = arith.truncf %5 : vector<16x50xf32> to vector<16x50xbf16>
    %c0_1 = arith.constant 0 : index
    %c0_2 = arith.constant 0 : index
    %7 = vector.load %arg2[%c0_1, %c0_2] : memref<50x32xbf16, #tpu.memory_space<vmem>>, vector<50x32xbf16>
    %cst = arith.constant dense<0.000000e+00> : vector<16x32xf32>
    %8 = tpu.matmul %6, %7, %cst {dimension_numbers = #tpu.dot_dimension_numbers<[1], [0], [0], [1], [0, 0, 1, 1], [], []>} : vector<16x50xbf16>, vector<50x32xbf16>, vector<16x32xf32> -> vector<16x32xf32>
    %9 = arith.truncf %8 : vector<16x32xf32> to vector<16x32xbf16>
    %c0_3 = arith.constant 0 : index
    %c0_4 = arith.constant 0 : index
    %10 = vector.load %arg3[%c0_3, %c0_4] : memref<32x128xbf16, #tpu.memory_space<vmem>>, vector<32x128xbf16>
    %cst_5 = arith.constant dense<0.000000e+00> : vector<16x128xf32>
    %11 = tpu.matmul %9, %10, %cst_5 {dimension_numbers = #tpu.dot_dimension_numbers<[1], [0], [0], [1], [0, 0, 1, 1], [], []>} : vector<16x32xbf16>, vector<32x128xbf16>, vector<16x128xf32> -> vector<16x128xf32>
    %c0_6 = arith.constant 0 : index
    %c0_7 = arith.constant 0 : index
    %12 = vector.load %arg4[%c0_6, %c0_7] : memref<1x128xf32, #tpu.memory_space<vmem>>, vector<1x128xf32>
    %13 = vector.broadcast %12 : vector<1x128xf32> to vector<16x128xf32>
    %14 = arith.addf %11, %13 : vector<16x128xf32>
    %15 = vector.shape_cast %14 : vector<16x128xf32> to vector<2x8x128xf32>
    %cst_8 = arith.constant dense<0xFF800000> : vector<2x128xf32>
    %16 = vector.multi_reduction <maximumf>, %15, %cst_8 [1] : vector<2x8x128xf32> to vector<2x128xf32>
    %17 = arith.mulf %16, %16 : vector<2x128xf32>
    %cst_9 = arith.constant dense<0.000000e+00> : vector<2xf32>
    %18 = vector.multi_reduction <add>, %17, %cst_9 [1] : vector<2x128xf32> to vector<2xf32>
    %19 = vector.shape_cast %18 : vector<2xf32> to vector<2x1xf32>
    %cst_10 = arith.constant 1.000000e-24 : f32
    %20 = vector.broadcast %cst_10 : f32 to vector<2x1xf32>
    %21 = arith.maximumf %19, %20 : vector<2x1xf32>
    %22 = math.rsqrt %21 : vector<2x1xf32>
    %23 = vector.broadcast %22 : vector<2x1xf32> to vector<2x128xf32>
    %24 = arith.mulf %16, %23 : vector<2x128xf32>
    %c0_11 = arith.constant 0 : index
    %c0_12 = arith.constant 0 : index
    %25 = vector.load %arg5[%c0_11, %c0_12] : memref<2x128xf32, #tpu.memory_space<vmem>>, vector<2x128xf32>
    tpu.vector_store %arg5[%c0_11, %c0_12], %24 {strides = array<i32>} : memref<2x128xf32, #tpu.memory_space<vmem>>, vector<2x128xf32>,
    return
  }
  func.func @transform_0(%arg0: i32) -> (i32, i32) {
    %c0_i32 = arith.constant 0 : i32
    %c0_i32_0 = arith.constant 0 : i32
    return %arg0, %c0_i32 : i32, i32
  }
  func.func @transform_1(%arg0: i32) -> (i32, i32) {
    %c0_i32 = arith.constant 0 : i32
    %c0_i32_0 = arith.constant 0 : i32
    %c0_i32_1 = arith.constant 0 : i32
    return %c0_i32, %c0_i32_0 : i32, i32
  }
  func.func @transform_2(%arg0: i32) -> (i32, i32) {
    %c0_i32 = arith.constant 0 : i32
    %c0_i32_0 = arith.constant 0 : i32
    %c0_i32_1 = arith.constant 0 : i32
    return %c0_i32, %c0_i32_0 : i32, i32
  }
  func.func @transform_3(%arg0: i32) -> (i32, i32) {
    %c0_i32 = arith.constant 0 : i32
    %c0_i32_0 = arith.constant 0 : i32
    %c0_i32_1 = arith.constant 0 : i32
    return %c0_i32, %c0_i32_0 : i32, i32
  }
  func.func @transform_4(%arg0: i32) -> (i32, i32) {
    %c0_i32 = arith.constant 0 : i32
    %c0_i32_0 = arith.constant 0 : i32
    return %arg0, %c0_i32 : i32, i32
  }
}

</mosaic_0001>

<llo_original>
// kernel: tpu_custom_call.1
$region0: #{tpu_custom_call.1}
  #allocation0 [shape = 'u32[]', space=smem, size = 0x4, offset = 0x4, fixed_abs, tag = 'smem constant byte address 0x4 - core index']
  #allocation1 [shape = 'u32[144,128]{1,0:T(1,128)}', space=vmem, size = 0x12000, scoped, tag = 'internal scratch']
  %s0 = inlined_call_operand.vmem [shape: s32[16,1], index: 0, kind: input, shape index: {}]
  %s1 = inlined_call_operand.vmem [shape: bf16[50,32], index: 1, kind: input, shape index: {}]
  %s2 = inlined_call_operand.vmem [shape: bf16[32,128], index: 2, kind: input, shape index: {}]
  %s3 = inlined_call_operand.vmem [shape: f32[1,128], index: 3, kind: input, shape index: {}]
  %s4 = inlined_call_operand.hbm [shape: f32[2,128], index: 4, kind: output, shape index: {}]
  %s5 = sld [smem:[#allocation0]]
  $region26: #{tpu_custom_call.1} parent=0
    _
  %s7 = ssub.s32 1, %s5
  %s8 = scalar_select 0, %s7, %s5
  $region1: #{tpu_custom_call.1} parent=0
    #allocation2 [shape = 'u8[1024]{0}', space=vmem, size = 0x400, scoped, tag = 'output window, operand 0, single buffered']
    #allocation3 [shape = 's32[1]{0}', space=sflag, size = 0x4, scoped, tag = 'scoped memory for tpu_custom_call.1']
    %9 = vsyncpa [#allocation3], 0
    // Predicated region
    $region2: #{tpu_custom_call.1} parent=1 // pred_check
      _
    $region3: #{tpu_custom_call.1} parent=1 // pred_check_branch
      %11 = sbr.rel (0) target = $region5
    $region4: #{tpu_custom_call.1} parent=1 // pred_region
      _
    $region5: #{tpu_custom_call.1} parent=1 // pred_fallthru
      _
    // Predicated region
    $region6: #{tpu_custom_call.1} parent=1 // pred_check
      _
    $region7: #{tpu_custom_call.1} parent=1 // pred_check_branch
      %13 = sbr.rel (0) target = $region9
    $region8: #{tpu_custom_call.1} parent=1 // pred_region
      _
    $region9: #{tpu_custom_call.1} parent=1 // pred_fallthru
      _
    // Predicated region
    $region10: #{tpu_custom_call.1} parent=1 // pred_check
      _
    $region11: #{tpu_custom_call.1} parent=1 // pred_check_branch
      %15 = sbr.rel (0) target = $region13
    $region12: #{tpu_custom_call.1} parent=1 // pred_region
      _
    $region13: #{tpu_custom_call.1} parent=1 // pred_fallthru
      _
    // Predicated region
    $region14: #{tpu_custom_call.1} parent=1 // pred_check
      _
    $region15: #{tpu_custom_call.1} parent=1 // pred_check_branch
      %17 = sbr.rel (0) target = $region17
    $region16: #{tpu_custom_call.1} parent=1 // pred_region
      _
    $region17: #{tpu_custom_call.1} parent=1 // pred_fallthru
      _
    %v19 = vld [vmem:[%s0] sm:$0xff]
    %v20 = vld [vmem:[%s0 + $0x8] sm:$0xff]
    %v21 = vlaneseq
    %v22 = vand.u32 %v21, 127
    %23 = vset.pattern.permute.xlu0 0
    %24 = vperm.xlu0 %23, %v19
    %v25 = vpop.permute.xlu0 %24
    %26 = vset.pattern.permute.xlu0 0
    %27 = vperm.xlu0 %26, %v20
    %v28 = vpop.permute.xlu0 %27
    %vm29 = vcmp.eq.s32.totalorder %v25, %v22
    %vm30 = vcmp.eq.s32.totalorder %v28, %v22
    %v31 = vsel %vm29, 1, 0
    %v32 = vsel %vm30, 1, 0
    %v33 = vcvt.s32.f32 %v31
    %v34 = vcvt.s32.f32 %v32
    %v35 = vpack.c.bf16 %v34, %v33
    %v36 = vld [vmem:[%s1] sm:$0xf]
    %v37 = vld [vmem:[%s1 + $0x4] sm:$0xf]
    %v38 = vld [vmem:[%s1 + $0x8] sm:$0xf]
    %v39 = vld [vmem:[%s1 + $0xc] sm:$0xf]
    %v40 = vld [vmem:[%s1 + $0x10] sm:$0xf]
    %v41 = vld [vmem:[%s1 + $0x14] sm:$0xf]
    %v42 = vld [vmem:[%s1 + $0x18] sm:$0x1]
    %v50 = vunpack.c.l.b16 %v36
    %v51 = vunpack.c.l.b16 %v37
    %v52 = vunpack.c.l.b16 %v38
    %v53 = vunpack.c.l.b16 %v39
    %v54 = vunpack.c.l.b16 %v40
    %v55 = vunpack.c.l.b16 %v41
    %v56 = vunpack.c.l.b16 %v42
    %v57 = vpack.c.b16 %v51, %v50
    %v58 = vpack.c.b16 %v53, %v52
    %v59 = vpack.c.b16 %v55, %v54
    %v60 = vpack.c.b16 %v56, %v56
    %vm64 = vcmask 408576
    %v66 = vsel %vm64, %v35, 0
    %vm68 = vcmask 1040384
    %v70 = vsel %vm68, %v60, 0
    %72 = vmatprep.subr.bf16.mxu0 0
    %73 = vmatpush1.bf16.msra.mxu0 %v57
    %74 = vmatprep.subr.bf16.mxu0 0
    %75 = vmatpush1.bf16.msra.mxu0 %v58
    %76 = vmatprep.subr.bf16.mxu0 0
    %77 = vmatpush1.bf16.msra.mxu0 %v59
    %78 = vmatprep.subr.bf16.mxu0 0
    %79 = vmatpush1.bf16.msra.mxu0 %v70
    %80 = vmatprep.subr.bf16.mxu0 0
    %81 = vmatpush1.bf16.msra.mxu0 0
    %82 = vmatprep.subr.bf16.mxu0 0
    %83 = vmatpush1.bf16.msra.mxu0 0
    %84 = vmatprep.subr.bf16.mxu0 0
    %85 = vmatpush1.bf16.msra.mxu0 0
    %86 = vmatprep.subr.bf16.mxu0 0
    %87 = vmatpush1.bf16.msra.mxu0 0
    %88 = vmatprep.subr.bf16.mxu0 0
    %89 = vmatpush1.bf16.msra.mxu0 0
    %90 = vmatprep.subr.bf16.mxu0 0
    %91 = vmatpush1.bf16.msra.mxu0 0
    %92 = vmatprep.subr.bf16.mxu0 0
    %93 = vmatpush1.bf16.msra.mxu0 0
    %94 = vmatprep.subr.bf16.mxu0 0
    %95 = vmatpush1.bf16.msra.mxu0 0
    %96 = vmatprep.subr.bf16.mxu0 0
    %97 = vmatpush1.bf16.msra.mxu0 0
    %98 = vmatprep.subr.bf16.mxu0 0
    %99 = vmatpush1.bf16.msra.mxu0 0
    %100 = vmatprep.subr.bf16.mxu0 0
    %101 = vmatpush1.bf16.msra.mxu0 0
    %102 = vmatprep.subr.bf16.mxu0 0
    %103 = vmatpush1.bf16.msra.mxu0 0
    %104 = vmatprep.mubr.bf16.mxu0 0
    %105 = vmatmul.mubr.bf16.gmra.mrb[0].mxu0 %v66
    %v106 = vpop.f32.mrb[0].mxu0
    %v107 = vadd.f32 0.0, %v106
    %v108 = vpop.f32.mrb[0].mxu0
    %v109 = vpop.f32.mrb[0].mxu0
    %v110 = vadd.f32 0.0, %v109
    %v111 = vpop.f32.mrb[0].mxu0
    %112 = vdwg.mxu0
    %v113 = vpack.c.bf16 %v110, %v107
    %v114 = vld [vmem:[%s2] sm:$0xf]
    %v115 = vld [vmem:[%s2 + $0x4] sm:$0xf]
    %v116 = vld [vmem:[%s2 + $0x8] sm:$0xf]
    %v117 = vld [vmem:[%s2 + $0xc] sm:$0xf]
    %v118 = vld [vmem:[%s3] sm:$0x1]
    %v120 = vlaneseq
    %v121 = vshrl.u32 %v120, 7
    %v122 = vsub.s32 0, %v121
    %v123 = vrot.slane %v118, %v122
    %v129 = vunpack.c.l.b16 %v114
    %v130 = vunpack.c.l.b16 %v115
    %v131 = vunpack.c.l.b16 %v116
    %v132 = vunpack.c.l.b16 %v117
    %v133 = vpack.c.b16 %v130, %v129
    %v134 = vpack.c.b16 %v132, %v131
    %vm137 = vcmask 261120
    %v139 = vsel %vm137, %v113, 0
    %141 = vmatprep.subr.bf16.mxu0 0
    %142 = vmatpush1.bf16.msra.mxu0 %v133
    %143 = vmatprep.subr.bf16.mxu0 0
    %144 = vmatpush1.bf16.msra.mxu0 %v134
    %145 = vmatprep.subr.bf16.mxu0 0
    %146 = vmatpush1.bf16.msra.mxu0 0
    %147 = vmatprep.subr.bf16.mxu0 0
    %148 = vmatpush1.bf16.msra.mxu0 0
    %149 = vmatprep.subr.bf16.mxu0 0
    %150 = vmatpush1.bf16.msra.mxu0 0
    %151 = vmatprep.subr.bf16.mxu0 0
    %152 = vmatpush1.bf16.msra.mxu0 0
    %153 = vmatprep.subr.bf16.mxu0 0
    %154 = vmatpush1.bf16.msra.mxu0 0
    %155 = vmatprep.subr.bf16.mxu0 0
    %156 = vmatpush1.bf16.msra.mxu0 0
    %157 = vmatprep.subr.bf16.mxu0 0
    %158 = vmatpush1.bf16.msra.mxu0 0
    %159 = vmatprep.subr.bf16.mxu0 0
    %160 = vmatpush1.bf16.msra.mxu0 0
    %161 = vmatprep.subr.bf16.mxu0 0
    %162 = vmatpush1.bf16.msra.mxu0 0
    %163 = vmatprep.subr.bf16.mxu0 0
    %164 = vmatpush1.bf16.msra.mxu0 0
    %165 = vmatprep.subr.bf16.mxu0 0
    %166 = vmatpush1.bf16.msra.mxu0 0
    %167 = vmatprep.subr.bf16.mxu0 0
    %168 = vmatpush1.bf16.msra.mxu0 0
    %169 = vmatprep.subr.bf16.mxu0 0
    %170 = vmatpush1.bf16.msra.mxu0 0
    %171 = vmatprep.subr.bf16.mxu0 0
    %172 = vmatpush1.bf16.msra.mxu0 0
    %173 = vmatprep.mubr.bf16.mxu0 0
    %174 = vmatmul.mubr.bf16.gmra.mrb[0].mxu0 %v139
    %v175 = vpop.f32.mrb[0].mxu0
    %v176 = vadd.f32 %v123, %v175
    %v177 = vpop.f32.mrb[0].mxu0
    %v178 = vpop.f32.mrb[0].mxu0
    %v179 = vadd.f32 %v123, %v178
    %v180 = vpop.f32.mrb[0].mxu0
    %181 = vdwg.mxu0
    %v182 = vrot.slane %v176, 4
    %v183 = vmax.f32 %v176, %v182
    %v184 = vrot.slane %v183, 2
    %v185 = vmax.f32 %v183, %v184
    %v186 = vrot.slane %v185, 1
    %v187 = vmax.f32 %v185, %v186
    %v188 = vrot.slane %v179, 4
    %v189 = vmax.f32 %v179, %v188
    %v190 = vrot.slane %v189, 2
    %v191 = vmax.f32 %v189, %v190
    %v192 = vrot.slane %v191, 1
    %v193 = vmax.f32 %v191, %v192
    %v194 = vmul.f32 %v187, %v187
    %v195 = vmul.f32 %v193, %v193
    %vm198 = vcmask 1041409
    %v199 = vsel %vm198, %v195, %v194
    %vm201 = vcmask 1041408
    %v202 = vsel %vm201, %v199, 0.0
    %203 = vadd.xlane.f32.xlu0 %v202
    %v204 = vpop.xlane.xlu0 %203
    %v205 = vmax.f32 %v204, 1e-24
    %v206 = vrsqrt.pop %v205
    %v208 = vrot.slane %v206, 1
    %v211 = vmul.f32 %v187, %v206
    %v212 = vmul.f32 %v193, %v208
    %v215 = vrot.slane %v212, 7
    %v216 = vsel %vm198, %v215, %v211
    %218 = vst [vmem:[#allocation2] sm:$0x3] %v216
    // Predicated region
    $region18: #{tpu_custom_call.1} parent=1 // pred_check
      _
    $region19: #{tpu_custom_call.1} parent=1 // pred_check_branch
      %220 = sbr.rel (0) target = $region21
    $region20: #{tpu_custom_call.1} parent=1 // pred_region
      %s222 = ssub.s32 32, 32
      %223 = vsyncadd [#allocation3], %s222
      %s225 = sshll.u32 [#allocation2], 4
      %s226 = int_to_ptr.vmem [resolvable:$true] %s225
      %228 = dma.vmem_to_hbm [thread:$0]  %s226, 32, %s4, [#allocation3]
    $region21: #{tpu_custom_call.1} parent=1 // pred_fallthru
      _
    // Predicated region
    $region22: #{tpu_custom_call.1} parent=1 // pred_check
      _
    $region23: #{tpu_custom_call.1} parent=1 // pred_check_branch
      %230 = sbr.rel (0) target = $region25
    $region24: #{tpu_custom_call.1} parent=1 // pred_region
      %231 = dma.done [#allocation3], 32
    $region25: #{tpu_custom_call.1} parent=1 // pred_fallthru
      _
    %232 = vsyncpa [#allocation3], 1

</llo_original>
